<compile_context>
chip_gen: v5e
topology: v5e:2x2
jax: 0.10.0
libtpu: 0.0.40
codegen_flags: <defaults>
</compile_context>

<pallas_src>
import jax
import jax.numpy as jnp
from jax.experimental import pallas as pl
from jax.experimental.pallas import tpu as pltpu

# ImageNet normalization constants (same values as the PyTorch module).
_MEAN_VALS = (0.485, 0.456, 0.406)
_STD_VALS = (0.229, 0.224, 0.225)
_INV_STD_VALS = tuple(1.0 / s for s in _STD_VALS)

_TARGET_BLOCK_BYTES = 2 << 20  # ~2 MiB blocks: near-roofline on all of v5e/v6e/v7x
_MIN_GRID_STEPS = 4            # >= 2 steps per TensorCore on v7x megacore


def _renorm_kernel(x_ref, o_ref):
    # Block: (TN, 3, TS, L).  Constants are compile-time scalars -> immediate
    # vsplat per channel.  Keep the arithmetic in f32, cast only on the store.
    for c in range(3):
        xc = x_ref[:, c:c + 1, :, :].astype(jnp.float32)
        o_ref[:, c:c + 1, :, :] = (
            (xc - _MEAN_VALS[c]) * _INV_STD_VALS[c]
        ).astype(o_ref.dtype)


def _cdiv(a, b):
    return -(-a // b)


def _choose_tiling(n, c, h, w, itemsize):
    """Pick (TN, TS, rows, lane) so x is viewed as (N, C, rows, lane) and tiled
    with blocks (TN, C, TS, lane).

    lane: largest multiple of 128 dividing H*W (capped at 4096); if H*W is not
          a multiple of 128, fall back to rows=H, lane=W (full-extent last dim).
    TS:   multiple of the dtype-packed sublane unit (8 f32 / 16 bf16 / 32 int8)
          or the full rows extent; sized toward _TARGET_BLOCK_BYTES and shrunk
          if needed to guarantee >= _MIN_GRID_STEPS total grid steps.
    TN:   batch grouping only when a whole plane is small and grouping does not
          drop the step count below the minimum.
    Partial edge blocks along rows are allowed (Pallas masks boundary stores).
    """
    hw = h * w
    sub_mult = 8 * max(1, 4 // itemsize)  # 8 for f32, 16 for bf16, 32 for int8

    if hw % 128 == 0:
        lane = 128
        for cand in range(128, min(hw, 4096) + 1, 128):
            if hw % cand == 0:
                lane = cand
        rows = hw // lane
    else:
        # Fallback: tile over H, keep the full (non-128-multiple) W as the last
        # block dim -- legal because it equals the array extent.
        lane, rows = w, h

    row_bytes = c * lane * itemsize
    max_ts = max(1, _TARGET_BLOCK_BYTES // row_bytes)

    if rows <= max_ts:
        ts = rows  # full extent: always a legal block dim
    else:
        ts = max(sub_mult, (max_ts // sub_mult) * sub_mult)

    # Guarantee enough grid steps for double-buffered streaming on both v7x
    # TensorCores (no-op when the data is too small to split further).
    while ts > sub_mult and n * _cdiv(rows, ts) < _MIN_GRID_STEPS:
        ts = max(sub_mult, ((ts // 2) // sub_mult) * sub_mult)

    base_steps = n * _cdiv(rows, ts)
    tn = 1
    block_bytes_1 = c * ts * lane * itemsize
    if ts == rows:  # whole plane already in one block -> consider batch grouping
        for cand in range(n, 1, -1):
            if n % cand != 0:
                continue
            steps = n // cand
            if (cand * block_bytes_1 <= _TARGET_BLOCK_BYTES
                    and steps >= min(_MIN_GRID_STEPS, base_steps)):
                tn = cand
                break
    return tn, ts, rows, lane


def input_renormalization(x: jax.Array, *, out_dtype=None, donate_x: bool = False) -> jax.Array:
    """(x - mean) / std with per-channel (C=3) ImageNet constants, NCHW layout.

    out_dtype: optionally emit a narrower dtype (e.g. bf16) to cut HBM write
               traffic; defaults to x.dtype (PyTorch semantics).
    donate_x:  alias the output onto x's buffer when the caller donates x.
    """
    n, c, h, w = x.shape
    assert c == 3, "InputReNormalization expects 3-channel (RGB) NCHW input"
    out_dtype = x.dtype if out_dtype is None else jnp.dtype(out_dtype)
    in_item = jnp.dtype(x.dtype).itemsize
    out_item = jnp.dtype(out_dtype).itemsize

    tn, ts, rows, lane = _choose_tiling(n, c, h, w, in_item)
    grid = (n // tn, _cdiv(rows, ts))

    # Free, contiguous reshape to the chosen (lane-dense when possible) view.
    x4 = x.reshape(n, c, rows, lane)

    compiler_kwargs = dict(dimension_semantics=("parallel", "parallel"))
    # Double-buffered input + output blocks (+50% slack).  With 2 MiB blocks
    # this never exceeds the 16 MiB v5e scoped default; only pathological
    # un-tileable shapes trigger an explicit raise.
    block_elems = tn * c * ts * lane
    vmem_need = 3 * block_elems * (in_item + out_item)
    if vmem_need > (16 << 20):
        compiler_kwargs["vmem_limit_bytes"] = int(vmem_need)

    aliases = {}
    if donate_x and out_dtype == x.dtype:
        aliases = {0: 0}

    out = pl.pallas_call(
        _renorm_kernel,
        out_shape=jax.ShapeDtypeStruct((n, c, rows, lane), out_dtype),
        grid_spec=pltpu.PrefetchScalarGridSpec(
            num_scalar_prefetch=0,
            grid=grid,
            in_specs=[
                pl.BlockSpec((tn, 3, ts, lane), lambda i, j: (i, 0, j, 0)),
            ],
            out_specs=pl.BlockSpec((tn, 3, ts, lane), lambda i, j: (i, 0, j, 0)),
        ),
        compiler_params=pltpu.CompilerParams(**compiler_kwargs),
        input_output_aliases=aliases,
    )(x4)

    # TODO(synk): for the order-of-magnitude win, feed uint8 images and call
    # with out_dtype=jnp.bfloat16 (or fuse into the first conv) -- this kernel
    # is HBM-roofline bound, so bytes/elem is the only big lever left.
    return out.reshape(n, c, h, w)


if __name__ == "__main__":
    key = jax.random.PRNGKey(0)
    # Small NCHW input: batch=2, channels=3 (RGB), spatial=16x16.
    x = jax.random.uniform(key, (2, 3, 16, 16), dtype=jnp.float32)

    out = jax.block_until_ready(input_renormalization(x))

    # Reference check in plain JAX (same semantics as the PyTorch forward).
    mean_ref = jnp.asarray(_MEAN_VALS, jnp.float32).reshape(1, 3, 1, 1)
    std_ref = jnp.asarray(_STD_VALS, jnp.float32).reshape(1, 3, 1, 1)
    ref = (x - mean_ref) / std_ref
    assert out.shape == x.shape and out.dtype == x.dtype
    assert jnp.allclose(out, ref, atol=1e-5, rtol=1e-5)

    print("KERNEL_OK")
</pallas_src>

<mosaic_0001>
module attributes {stable_mosaic.version = 11 : i64} {
  func.func @_renorm_kernel(%arg0: i32, %arg1: i32, %arg2: memref<1x3x1x256xf32, #tpu.memory_space<vmem>>, %arg3: memref<1x3x1x256xf32, #tpu.memory_space<vmem>>) attributes {dimension_semantics = [#tpu.dimension_semantics<parallel>, #tpu.dimension_semantics<parallel>], iteration_bounds = array<i64: 2, 1>, scalar_prefetch = 0 : i64, scratch_operands = 0 : i64, tpu.core_type = #tpu.core_type<tc>, window_params = [{transform_indices = @transform_0, window_bounds = array<i64: 1, 3, 1, 256>}, {transform_indices = @transform_1, window_bounds = array<i64: 1, 3, 1, 256>}]} {
    %c0 = arith.constant 0 : index
    %c0_0 = arith.constant 0 : index
    %c0_1 = arith.constant 0 : index
    %c0_2 = arith.constant 0 : index
    %0 = vector.load %arg2[%c0, %c0_0, %c0_1, %c0_2] : memref<1x3x1x256xf32, #tpu.memory_space<vmem>>, vector<1x1x1x256xf32>
    %cst = arith.constant 4.850000e-01 : f32
    %1 = vector.broadcast %cst : f32 to vector<1x1x1x256xf32>
    %2 = arith.subf %0, %1 : vector<1x1x1x256xf32>
    %cst_3 = arith.constant 4.36681223 : f32
    %3 = vector.broadcast %cst_3 : f32 to vector<1x1x1x256xf32>
    %4 = arith.mulf %2, %3 : vector<1x1x1x256xf32>
    %c0_4 = arith.constant 0 : index
    %c0_5 = arith.constant 0 : index
    %c0_6 = arith.constant 0 : index
    %c0_7 = arith.constant 0 : index
    %5 = vector.load %arg3[%c0_4, %c0_5, %c0_6, %c0_7] : memref<1x3x1x256xf32, #tpu.memory_space<vmem>>, vector<1x1x1x256xf32>
    tpu.vector_store %arg3[%c0_4, %c0_5, %c0_6, %c0_7], %4 {strides = array<i32>} : memref<1x3x1x256xf32, #tpu.memory_space<vmem>>, vector<1x1x1x256xf32>,
    %c0_8 = arith.constant 0 : index
    %c1 = arith.constant 1 : index
    %c0_9 = arith.constant 0 : index
    %c0_10 = arith.constant 0 : index
    %6 = vector.load %arg2[%c0_8, %c1, %c0_9, %c0_10] : memref<1x3x1x256xf32, #tpu.memory_space<vmem>>, vector<1x1x1x256xf32>
    %cst_11 = arith.constant 4.560000e-01 : f32
    %7 = vector.broadcast %cst_11 : f32 to vector<1x1x1x256xf32>
    %8 = arith.subf %6, %7 : vector<1x1x1x256xf32>
    %cst_12 = arith.constant 4.46428585 : f32
    %9 = vector.broadcast %cst_12 : f32 to vector<1x1x1x256xf32>
    %10 = arith.mulf %8, %9 : vector<1x1x1x256xf32>
    %c0_13 = arith.constant 0 : index
    %c1_14 = arith.constant 1 : index
    %c0_15 = arith.constant 0 : index
    %c0_16 = arith.constant 0 : index
    %11 = vector.load %arg3[%c0_13, %c1_14, %c0_15, %c0_16] : memref<1x3x1x256xf32, #tpu.memory_space<vmem>>, vector<1x1x1x256xf32>
    tpu.vector_store %arg3[%c0_13, %c1_14, %c0_15, %c0_16], %10 {strides = array<i32>} : memref<1x3x1x256xf32, #tpu.memory_space<vmem>>, vector<1x1x1x256xf32>,
    %c0_17 = arith.constant 0 : index
    %c2 = arith.constant 2 : index
    %c0_18 = arith.constant 0 : index
    %c0_19 = arith.constant 0 : index
    %12 = vector.load %arg2[%c0_17, %c2, %c0_18, %c0_19] : memref<1x3x1x256xf32, #tpu.memory_space<vmem>>, vector<1x1x1x256xf32>
    %cst_20 = arith.constant 4.060000e-01 : f32
    %13 = vector.broadcast %cst_20 : f32 to vector<1x1x1x256xf32>
    %14 = arith.subf %12, %13 : vector<1x1x1x256xf32>
    %cst_21 = arith.constant 4.44444466 : f32
    %15 = vector.broadcast %cst_21 : f32 to vector<1x1x1x256xf32>
    %16 = arith.mulf %14, %15 : vector<1x1x1x256xf32>
    %c0_22 = arith.constant 0 : index
    %c2_23 = arith.constant 2 : index
    %c0_24 = arith.constant 0 : index
    %c0_25 = arith.constant 0 : index
    %17 = vector.load %arg3[%c0_22, %c2_23, %c0_24, %c0_25] : memref<1x3x1x256xf32, #tpu.memory_space<vmem>>, vector<1x1x1x256xf32>
    tpu.vector_store %arg3[%c0_22, %c2_23, %c0_24, %c0_25], %16 {strides = array<i32>} : memref<1x3x1x256xf32, #tpu.memory_space<vmem>>, vector<1x1x1x256xf32>,
    return
  }
  func.func @transform_0(%arg0: i32, %arg1: i32) -> (i32, i32, i32, i32) {
    %c0_i32 = arith.constant 0 : i32
    %c0_i32_0 = arith.constant 0 : i32
    %c0_i32_1 = arith.constant 0 : i32
    return %arg0, %c0_i32, %arg1, %c0_i32_0 : i32, i32, i32, i32
  }
  func.func @transform_1(%arg0: i32, %arg1: i32) -> (i32, i32, i32, i32) {
    %c0_i32 = arith.constant 0 : i32
    %c0_i32_0 = arith.constant 0 : i32
    %c0_i32_1 = arith.constant 0 : i32
    return %arg0, %c0_i32, %arg1, %c0_i32_0 : i32, i32, i32, i32
  }
}

</mosaic_0001>

<llo_original>
// kernel: tpu_custom_call.1
$region0: #{tpu_custom_call.1}
  #allocation0 [shape = 'u32[]', space=smem, size = 0x4, offset = 0x4, fixed_abs, tag = 'smem constant byte address 0x4 - core index']
  #allocation1 [shape = 'u32[72,128]{1,0:T(1,128)}', space=vmem, size = 0x9000, scoped, tag = 'internal scratch']
  %s0 = inlined_call_operand.hbm [shape: f32[2,3,1,256], index: 0, kind: input, shape index: {}]
  %s1 = inlined_call_operand.hbm [shape: f32[2,3,1,256], index: 1, kind: output, shape index: {}]
  %s2 = sld [smem:[#allocation0]]
  $region41: #{tpu_custom_call.1} parent=0
    _
  %s4 = ssub.s32 1, %s2
  %s5 = scalar_select 0, %s4, %s2
  $region1: #{tpu_custom_call.1} parent=0
    #allocation2 [shape = 'u8[6144]{0}', space=vmem, size = 0x1800, scoped, tag = 'input window, operand 0']
    #allocation3 [shape = 's32[2]{0}', space=sflag, size = 0x8, scoped, tag = 'scoped memory for tpu_custom_call.1']
    #allocation4 [shape = 's32[2]{0}', space=sflag, size = 0x8, scoped, tag = 'scoped memory for tpu_custom_call.1']
    #allocation5 [shape = 'u8[6144]{0}', space=vmem, size = 0x1800, scoped, tag = 'output window, operand 0']
    %6 = vsyncpa [#allocation3], 0
    %s7 = scalar_lea.sflag [#allocation3], 1
    %8 = vsyncpa %s7, 0
    %9 = vsyncpa [#allocation4], 0
    %s10 = scalar_lea.sflag [#allocation4], 1
    %11 = vsyncpa %s10, 0
    loop: start=0, step=1, limit=4
    $region2: #{tpu_custom_call.1} parent=1 // loop_pre_header
      _
    $region3: #{tpu_custom_call.1} parent=1 // loop_header
      %s13 = sphi 0, %s17
      %p14 = scmp.ge.s32.totalorder %s13, 4
      %s20 = sphi 0, %s32
      %s21 = sphi 0, %s28
      %s22 = sphi 0, %s20
      %s23 = sphi 0, %s21
      %s24 = sphi 0, %s22
      %s25 = sphi 0, %s23
      %s37 = sphi 0, %s39
      %s40 = sphi 0, %s37
      %s41 = sphi 0, %s40
      %s57 = sphi 0, %s41
      %s65 = sphi 0, %s67
      %s68 = sphi 0, %s65
      %s69 = sphi 0, %s68
      %s85 = sphi 0, %s69
    $region4: #{tpu_custom_call.1} parent=1 // loop_header_branch
      %16 = sbr.rel (%p14) target = $region8
    $region5: #{tpu_custom_call.1} parent=1 // loop_body
      %s18 = ssub.s32 %s13, 1
      %s19 = ssub.s32 %s13, 2
      %s26 = sadd.s32 1, %s21
      %p27 = scmp.ge.s32.totalorder %s26, 1
      %s28 = scalar_select %p27, 0, %s26
      %s29 = sadd.s32 1, %s20
      %s30 = scalar_select %p27, %s29, %s20
      %p31 = scmp.ge.s32.totalorder %s30, 2
      %s32 = scalar_select %p31, 0, %s30
      %s33 = ssub.s32 %s20, %s32
      %s34 = ssub.s32 %s21, %s28
      %s35 = sor.u32 %s33, %s34
      %p36 = scmp.eq.s32.totalorder %s35, 0
      %s38 = sadd.s32 %s37, 1
      %s39 = scalar_select %p36, %s37, %s38
      %p42 = pneg %p36
      %p43 = scmp.eq.s32.totalorder %s13, 1
      %p44 = por %p42, %p43
      %p45 = scmp.ne.s32.totalorder %s37, %s40
      %p46 = scmp.eq.s32.totalorder %s13, 0
      %p47 = por %p45, %p46
      %p48 = scmp.ne.s32.totalorder %s37, %s40
      %p49 = scmp.eq.s32.totalorder %s18, 1
      %p50 = por %p48, %p49
      %p51 = scmp.ne.s32.totalorder %s40, %s41
      %p52 = scmp.eq.s32.totalorder %s18, 0
      %p53 = por %p51, %p52
      %p54 = scmp.ne.s32.totalorder %s40, %s41
      %p55 = scmp.eq.s32.totalorder %s19, 1
      %p56 = por %p54, %p55
      %p58 = scmp.ne.s32.totalorder %s41, %s57
      %p59 = scmp.eq.s32.totalorder %s19, 0
      %p60 = por %p58, %p59
      %s61 = ssub.s32 %s20, %s32
      %s62 = ssub.s32 %s21, %s28
      %s63 = sor.u32 %s61, %s62
      %p64 = scmp.eq.s32.totalorder %s63, 0
      %s66 = sadd.s32 %s65, 1
      %s67 = scalar_select %p64, %s65, %s66
      %p70 = pneg %p64
      %p71 = scmp.eq.s32.totalorder %s13, 1
      %p72 = por %p70, %p71
      %p73 = scmp.ne.s32.totalorder %s65, %s68
      %p74 = scmp.eq.s32.totalorder %s13, 0
      %p75 = por %p73, %p74
      %p76 = scmp.ne.s32.totalorder %s65, %s68
      %p77 = scmp.eq.s32.totalorder %s18, 1
      %p78 = por %p76, %p77
      %p79 = scmp.ne.s32.totalorder %s68, %s69
      %p80 = scmp.eq.s32.totalorder %s18, 0
      %p81 = por %p79, %p80
      %p82 = scmp.ne.s32.totalorder %s68, %s69
      %p83 = scmp.eq.s32.totalorder %s19, 1
      %p84 = por %p82, %p83
      %p86 = scmp.ne.s32.totalorder %s69, %s85
      %p87 = scmp.eq.s32.totalorder %s19, 0
      %p88 = por %p86, %p87
      %p89 = scmp.le.s32.totalorder 1, %s13
      %p90 = scmp.lt.s32.totalorder %s13, 3
      %p91 = pnand %p89, %p90
      %p92 = pneg %p91
      // Predicated region
      $region9: #{tpu_custom_call.1} parent=5 // pred_check
        _
      $region10: #{tpu_custom_call.1} parent=5 // pred_check_branch
        %94 = sbr.rel (%p91) target = $region12
      $region11: #{tpu_custom_call.1} parent=5 // pred_region
        %s95 = ssub.s32 %s13, 1
      $region12: #{tpu_custom_call.1} parent=5 // pred_fallthru
        _
      %p96 = scmp.lt.s32.totalorder %s13, 2
      // Predicated region
      $region13: #{tpu_custom_call.1} parent=5 // pred_check
        %p97 = pneg %p96
      $region14: #{tpu_custom_call.1} parent=5 // pred_check_branch
        %99 = sbr.rel (%p97) target = $region16
      $region15: #{tpu_custom_call.1} parent=5 // pred_region
        // Predicated region
        $region17: #{tpu_custom_call.1} parent=15 // pred_check
          %p100 = pneg %p47
        $region18: #{tpu_custom_call.1} parent=15 // pred_check_branch
          %102 = sbr.rel (%p100) target = $region20
        $region19: #{tpu_custom_call.1} parent=15 // pred_region
          %s103 = sand.u32 %s37, 1
          %s104 = scalar_lea.sflag [#allocation3], %s103
          %s105 = sand.u32 %s37, 1
          %s106 = smul.addr %s105, 6
          %s107 = scalar_lea.vmem [#allocation2], %s106
          %109 = vsyncadd %s104, 0
          %s110 = smul.addr %s21, 2
          %s111 = smul.addr %s20, 6
          %s112 = sadd.s32 %s110, %s111
          %s113 = scalar_lea.hbm %s0, %s112
          %s114 = sshll.u32 %s113, 4
          %s115 = int_to_ptr.hbm [resolvable:$true] %s114
          %s116 = sshll.u32 %s107, 4
          %s117 = int_to_ptr.vmem [resolvable:$true] %s116
          %122 = dma.hbm_to_vmem [thread:$0]  %s115, 96, %s117, %s104, 32, 32, 2
        $region20: #{tpu_custom_call.1} parent=15 // pred_fallthru
          _
      $region16: #{tpu_custom_call.1} parent=5 // pred_fallthru
        _
      %p123 = scmp.le.s32.totalorder 1, %s13
      %p124 = scmp.lt.s32.totalorder %s13, 3
      %p125 = pnand %p123, %p124
      %p126 = pneg %p125
      // Predicated region
      $region21: #{tpu_custom_call.1} parent=5 // pred_check
        _
      $region22: #{tpu_custom_call.1} parent=5 // pred_check_branch
        %128 = sbr.rel (%p125) target = $region24
      $region23: #{tpu_custom_call.1} parent=5 // pred_region
        %s129 = ssub.s32 %s13, 1
        %s130 = sand.u32 %s40, 1
        %s131 = scalar_lea.sflag [#allocation3], %s130
        %s132 = sand.u32 %s40, 1
        %s133 = smul.addr %s132, 6
        %s134 = scalar_lea.vmem [#allocation2], %s133
        // Predicated region
        $region25: #{tpu_custom_call.1} parent=23 // pred_check
          %p135 = pneg %p53
        $region26: #{tpu_custom_call.1} parent=23 // pred_check_branch
          %137 = sbr.rel (%p135) target = $region28
        $region27: #{tpu_custom_call.1} parent=23 // pred_region
          %139 = dma.done %s131, 96
        $region28: #{tpu_custom_call.1} parent=23 // pred_fallthru
          _
        %s140 = sand.u32 %s40, 1
        %s141 = scalar_lea.sflag [#allocation3], %s140
        %s142 = sand.u32 %s40, 1
        %s143 = smul.addr %s142, 6
        %s144 = scalar_lea.vmem [#allocation2], %s143
        %p145 = pneg %p53
        %p146 = pneg %p50
        %p147 = pneg %p81
        %p148 = pneg %p78
        %s149 = sand.u32 %s68, 1
        %s150 = scalar_lea.sflag [#allocation4], %s149
        %s151 = sand.u32 %s68, 1
        %s152 = smul.addr %s151, 6
        %s153 = scalar_lea.vmem [#allocation5], %s152
        %v154 = vld [vmem:[%s134] sm:$0x3]
        %v155 = vsub.f32 %v154, 0.485
        %v156 = vmul.f32 %v155, 4.366812
        %v157 = vlaneseq
        %vm158 = vcmp.ge.s32.totalorder %v157, 0
        %vm159 = vcmp.lt.s32.totalorder %v157, 256
        %vm160 = vmand %vm158, %vm159
        %161 = vst.msk [vmem:[%s153] sm:$0x3] %vm160, %v156
        %s162 = scalar_lea.vmem %s134, 2 [#allocation2]
        %v163 = vld [vmem:[%s162] sm:$0x3]
        %v164 = vsub.f32 %v163, 0.456
        %v165 = vmul.f32 %v164, 4.464286
        %s166 = scalar_lea.vmem %s153, 2 [#allocation5]
        %167 = vst.msk [vmem:[%s166] sm:$0x3] %vm160, %v165
        %s168 = scalar_lea.vmem %s134, 4 [#allocation2]
        %v169 = vld [vmem:[%s168] sm:$0x3]
        %v170 = vsub.f32 %v169, 0.406
        %v171 = vmul.f32 %v170, 4.4444447
        %s172 = scalar_lea.vmem %s153, 4 [#allocation5]
        %173 = vst.msk [vmem:[%s172] sm:$0x3] %vm160, %v171
        %s174 = sand.u32 %s68, 1
        %s175 = scalar_lea.sflag [#allocation4], %s174
        %s176 = sand.u32 %s68, 1
        %s177 = smul.addr %s176, 6
        %s178 = scalar_lea.vmem [#allocation5], %s177
        // Predicated region
        $region29: #{tpu_custom_call.1} parent=23 // pred_check
          %p179 = pneg %p78
        $region30: #{tpu_custom_call.1} parent=23 // pred_check_branch
          %181 = sbr.rel (%p179) target = $region32
        $region31: #{tpu_custom_call.1} parent=23 // pred_region
          %183 = vsyncadd %s175, 0
          %s184 = smul.addr %s23, 2
          %s185 = smul.addr %s22, 6
          %s186 = sadd.s32 %s184, %s185
          %s187 = scalar_lea.hbm %s1, %s186
          %s188 = sshll.u32 %s178, 4
          %s189 = int_to_ptr.vmem [resolvable:$true] %s188
          %s190 = sshll.u32 %s187, 4
          %s191 = int_to_ptr.hbm [resolvable:$true] %s190
          %196 = dma.vmem_to_hbm [thread:$0]  %s189, 96, %s191, %s175, 32, 32, 2
        $region32: #{tpu_custom_call.1} parent=23 // pred_fallthru
          _
      $region24: #{tpu_custom_call.1} parent=5 // pred_fallthru
        _
      %p197 = scmp.le.s32.totalorder 2, %s13
      // Predicated region
      $region33: #{tpu_custom_call.1} parent=5 // pred_check
        %p198 = pneg %p197
      $region34: #{tpu_custom_call.1} parent=5 // pred_check_branch
        %200 = sbr.rel (%p198) target = $region36
      $region35: #{tpu_custom_call.1} parent=5 // pred_region
        %s201 = ssub.s32 %s13, 2
        // Predicated region
        $region37: #{tpu_custom_call.1} parent=35 // pred_check
          %p202 = pneg %p84
        $region38: #{tpu_custom_call.1} parent=35 // pred_check_branch
          %204 = sbr.rel (%p202) target = $region40
        $region39: #{tpu_custom_call.1} parent=35 // pred_region
          %s205 = sand.u32 %s69, 1
          %s206 = scalar_lea.sflag [#allocation4], %s205
          %s207 = sand.u32 %s69, 1
          %s208 = smul.addr %s207, 6
          %s209 = scalar_lea.vmem [#allocation5], %s208
          %211 = dma.done %s206, 96
        $region40: #{tpu_custom_call.1} parent=35 // pred_fallthru
          _
      $region36: #{tpu_custom_call.1} parent=5 // pred_fallthru
        _
    $region6: #{tpu_custom_call.1} parent=1 // loop_footer
      %s17 = sadd.s32 1, %s13
    $region7: #{tpu_custom_call.1} parent=1 // loop_footer_branch
      %12 = sbr.rel target = $region3
    $region8: #{tpu_custom_call.1} parent=1 // loop_exit
      _
    %212 = vsyncpa [#allocation3], 1
    %s213 = scalar_lea.sflag [#allocation3], 1
    %214 = vsyncpa %s213, 1
    %215 = vsyncpa [#allocation4], 1
    %s216 = scalar_lea.sflag [#allocation4], 1
    %217 = vsyncpa %s216, 1

</llo_original>
